<compile_context>
chip_gen: v6e
topology: v6e:2x2x1
jax: 0.10.0
libtpu: 0.0.40
codegen_flags: <defaults>
</compile_context>

<pallas_src>
import jax
import jax.numpy as jnp
from jax.experimental import pallas as pl
from jax.experimental.pallas import tpu as pltpu

# Model hyperparameters (mirroring the PyTorch module's structure).
INPUT_SIZE = 16          # layer widths: 16*16=256, 16*8=128, 16*4=64, 16
CODE_SIZE = 8
BATCH = 2

_SELU_ALPHA = 1.6732632423543772
_SELU_SCALE = 1.0507009873554805


def _round_up(x, m):
    return ((x + m - 1) // m) * m


def _selu_ref(z):
    """Standard SELU (reference / PyTorch semantics)."""
    return _SELU_SCALE * jnp.where(z > 0, z, _SELU_ALPHA * (jnp.exp(z) - 1.0))


def _selu_unscaled(z):
    """SELU with the output scale folded into the *next* layer's weights."""
    return jnp.where(z > 0, z, _SELU_ALPHA * (jnp.exp(z) - 1.0))


def decoder_kernel(code_ref,
                   w1_ref, b1_ref,
                   w2_ref, b2_ref,
                   w3_ref, b3_ref,
                   w4_ref, b4_ref,
                   out_ref):
    x = code_ref[...]                                                   # (TM, C)

    # dec_linear_1 (no activation, matching the PyTorch forward)
    h = jnp.dot(x, w1_ref[...], preferred_element_type=jnp.float32) + b1_ref[...]

    # selu(dec_linear_2)  — SELU scale pre-folded into w3
    h = _selu_unscaled(
        jnp.dot(h, w2_ref[...], preferred_element_type=jnp.float32) + b2_ref[...])

    # selu(dec_linear_3)  — SELU scale pre-folded into w4
    h = _selu_unscaled(
        jnp.dot(h, w3_ref[...], preferred_element_type=jnp.float32) + b3_ref[...])

    # dec_linear_4 (no activation)
    out_ref[...] = (jnp.dot(h, w4_ref[...], preferred_element_type=jnp.float32)
                    + b4_ref[...]).astype(out_ref.dtype)


def init_linear(key, fan_in, fan_out):
    """PyTorch-like uniform(-1/sqrt(fan_in), 1/sqrt(fan_in)) init.

    Weight stored as (fan_in, fan_out) — transpose of torch.nn.Linear.weight —
    so the kernel does x @ W directly. Bias stored as (1, fan_out) for clean 2D
    broadcasting in VMEM.
    """
    kw, kb = jax.random.split(key)
    bound = 1.0 / jnp.sqrt(jnp.float32(fan_in))
    w = jax.random.uniform(kw, (fan_in, fan_out), jnp.float32, -bound, bound)
    b = jax.random.uniform(kb, (1, fan_out), jnp.float32, -bound, bound)
    return w, b


def fold_selu_scale(params):
    """One-time param prep: fold the SELU output scale into the next layer's W.

    selu(z) = SCALE * g(z)  =>  selu(z) @ W = g(z) @ (SCALE * W), bias unchanged.
    """
    (w1, b1), (w2, b2), (w3, b3), (w4, b4) = params
    return ((w1, b1),
            (w2, b2),
            (w3 * _SELU_SCALE, b3),
            (w4 * _SELU_SCALE, b4))


def decoder_forward(code, kernel_params, *, block_m=128):
    """Decode a batch of codes (N, CODE_SIZE) -> (N, INPUT_SIZE).

    `kernel_params` must be the output of `fold_selu_scale(params)`.
    """
    (w1, b1), (w2, b2), (w3, b3), (w4, b4) = kernel_params
    n, c = code.shape
    out_dim = w4.shape[1]

    # Batch tile: at least one sublane tile (8 rows), at most block_m rows.
    tm = min(block_m, _round_up(max(n, 1), 8))
    n_pad = _round_up(n, tm)
    if n_pad != n:
        code = jnp.pad(code, ((0, n_pad - n), (0, 0)))

    grid = (n_pad // tm,)

    def const(i):           # weights/biases: same block every grid step
        return (0, 0)       # -> DMA'd once, resident in VMEM across steps

    out = pl.pallas_call(
        decoder_kernel,
        out_shape=jax.ShapeDtypeStruct((n_pad, out_dim), jnp.float32),
        grid=grid,
        in_specs=[
            pl.BlockSpec((tm, c), lambda i: (i, 0)),          # code: tiled over batch
            pl.BlockSpec(w1.shape, const), pl.BlockSpec(b1.shape, const),
            pl.BlockSpec(w2.shape, const), pl.BlockSpec(b2.shape, const),
            pl.BlockSpec(w3.shape, const), pl.BlockSpec(b3.shape, const),
            pl.BlockSpec(w4.shape, const), pl.BlockSpec(b4.shape, const),
        ],
        out_specs=pl.BlockSpec((tm, out_dim), lambda i: (i, 0)),
        compiler_params=pltpu.CompilerParams(
            dimension_semantics=("parallel",)),                # megacore-shard the batch
    )(code, w1, b1, w2, b2, w3, b3, w4, b4)

    return out[:n]


def decoder_reference(code, params):
    """Pure-JAX reference with the original (unfolded) parameters."""
    (w1, b1), (w2, b2), (w3, b3), (w4, b4) = params
    h = code @ w1 + b1
    h = _selu_ref(h @ w2 + b2)
    h = _selu_ref(h @ w3 + b3)
    return h @ w4 + b4


if __name__ == "__main__":
    key = jax.random.PRNGKey(0)
    k_in, k_big, k1, k2, k3, k4 = jax.random.split(key, 6)

    # Layer dims mirroring the nn.Linear shapes in __init__.
    d0, d1, d2, d3, d4 = (CODE_SIZE, INPUT_SIZE * 16, INPUT_SIZE * 8,
                          INPUT_SIZE * 4, INPUT_SIZE)

    params = (
        init_linear(k1, d0, d1),
        init_linear(k2, d1, d2),
        init_linear(k3, d2, d3),
        init_linear(k4, d3, d4),
    )
    kparams = fold_selu_scale(params)   # one-time prep for the kernel

    fwd = jax.jit(decoder_forward)

    # Small batch (matches the module's typical usage).
    code = jax.random.normal(k_in, (BATCH, CODE_SIZE), jnp.float32)
    out = jax.block_until_ready(fwd(code, kparams))
    ref = decoder_reference(code, params)
    assert out.shape == (BATCH, INPUT_SIZE)
    assert jnp.allclose(out, ref, atol=1e-4, rtol=1e-5), float(jnp.max(jnp.abs(out - ref)))

    # Larger batch exercises the multi-step grid (weights stay VMEM-resident).
    code_big = jax.random.normal(k_big, (512, CODE_SIZE), jnp.float32)
    out_big = jax.block_until_ready(fwd(code_big, kparams))
    ref_big = decoder_reference(code_big, params)
    assert out_big.shape == (512, INPUT_SIZE)
    assert jnp.allclose(out_big, ref_big, atol=1e-4, rtol=1e-5), \
        float(jnp.max(jnp.abs(out_big - ref_big)))

    print("KERNEL_OK")
</pallas_src>

<mosaic_0001>
module attributes {stable_mosaic.version = 11 : i64} {
  func.func @decoder_kernel(%arg0: i32, %arg1: memref<8x8xf32, #tpu.memory_space<vmem>>, %arg2: memref<8x256xf32, #tpu.memory_space<vmem>>, %arg3: memref<1x256xf32, #tpu.memory_space<vmem>>, %arg4: memref<256x128xf32, #tpu.memory_space<vmem>>, %arg5: memref<1x128xf32, #tpu.memory_space<vmem>>, %arg6: memref<128x64xf32, #tpu.memory_space<vmem>>, %arg7: memref<1x64xf32, #tpu.memory_space<vmem>>, %arg8: memref<64x16xf32, #tpu.memory_space<vmem>>, %arg9: memref<1x16xf32, #tpu.memory_space<vmem>>, %arg10: memref<8x16xf32, #tpu.memory_space<vmem>>) attributes {dimension_semantics = [#tpu.dimension_semantics<parallel>], iteration_bounds = array<i64: 1>, scalar_prefetch = 0 : i64, scratch_operands = 0 : i64, tpu.core_type = #tpu.core_type<tc>, window_params = [{transform_indices = @transform_0, window_bounds = array<i64: 8, 8>}, {pipeline_mode = #tpu.pipeline_mode<synchronous>, transform_indices = @transform_1, window_bounds = array<i64: 8, 256>}, {pipeline_mode = #tpu.pipeline_mode<synchronous>, transform_indices = @transform_2, window_bounds = array<i64: 1, 256>}, {pipeline_mode = #tpu.pipeline_mode<synchronous>, transform_indices = @transform_3, window_bounds = array<i64: 256, 128>}, {pipeline_mode = #tpu.pipeline_mode<synchronous>, transform_indices = @transform_4, window_bounds = array<i64: 1, 128>}, {pipeline_mode = #tpu.pipeline_mode<synchronous>, transform_indices = @transform_5, window_bounds = array<i64: 128, 64>}, {pipeline_mode = #tpu.pipeline_mode<synchronous>, transform_indices = @transform_6, window_bounds = array<i64: 1, 64>}, {pipeline_mode = #tpu.pipeline_mode<synchronous>, transform_indices = @transform_7, window_bounds = array<i64: 64, 16>}, {pipeline_mode = #tpu.pipeline_mode<synchronous>, transform_indices = @transform_8, window_bounds = array<i64: 1, 16>}, {transform_indices = @transform_9, window_bounds = array<i64: 8, 16>}]} {
    %c0 = arith.constant 0 : index
    %c0_0 = arith.constant 0 : index
    %0 = vector.load %arg1[%c0, %c0_0] : memref<8x8xf32, #tpu.memory_space<vmem>>, vector<8x8xf32>
    %c0_1 = arith.constant 0 : index
    %c0_2 = arith.constant 0 : index
    %1 = vector.load %arg2[%c0_1, %c0_2] : memref<8x256xf32, #tpu.memory_space<vmem>>, vector<8x256xf32>
    %cst = arith.constant dense<0.000000e+00> : vector<8x256xf32>
    %2 = tpu.matmul %0, %1, %cst {dimension_numbers = #tpu.dot_dimension_numbers<[1], [0], [0], [1], [0, 0, 1, 1], [], []>} : vector<8x8xf32>, vector<8x256xf32>, vector<8x256xf32> -> vector<8x256xf32>
    %c0_3 = arith.constant 0 : index
    %c0_4 = arith.constant 0 : index
    %3 = vector.load %arg3[%c0_3, %c0_4] : memref<1x256xf32, #tpu.memory_space<vmem>>, vector<1x256xf32>
    %4 = vector.broadcast %3 : vector<1x256xf32> to vector<8x256xf32>
    %5 = arith.addf %2, %4 : vector<8x256xf32>
    %c0_5 = arith.constant 0 : index
    %c0_6 = arith.constant 0 : index
    %6 = vector.load %arg4[%c0_5, %c0_6] : memref<256x128xf32, #tpu.memory_space<vmem>>, vector<256x128xf32>
    %cst_7 = arith.constant dense<0.000000e+00> : vector<8x128xf32>
    %7 = tpu.matmul %5, %6, %cst_7 {dimension_numbers = #tpu.dot_dimension_numbers<[1], [0], [0], [1], [0, 0, 1, 1], [], []>} : vector<8x256xf32>, vector<256x128xf32>, vector<8x128xf32> -> vector<8x128xf32>
    %c0_8 = arith.constant 0 : index
    %c0_9 = arith.constant 0 : index
    %8 = vector.load %arg5[%c0_8, %c0_9] : memref<1x128xf32, #tpu.memory_space<vmem>>, vector<1x128xf32>
    %9 = vector.broadcast %8 : vector<1x128xf32> to vector<8x128xf32>
    %10 = arith.addf %7, %9 : vector<8x128xf32>
    %cst_10 = arith.constant 0.000000e+00 : f32
    %11 = vector.broadcast %cst_10 : f32 to vector<8x128xf32>
    %12 = arith.cmpf ogt, %10, %11 : vector<8x128xf32>
    %13 = math.exp %10 : vector<8x128xf32>
    %cst_11 = arith.constant 1.000000e+00 : f32
    %14 = vector.broadcast %cst_11 : f32 to vector<8x128xf32>
    %15 = arith.subf %13, %14 : vector<8x128xf32>
    %cst_12 = arith.constant 1.67326319 : f32
    %16 = vector.broadcast %cst_12 : f32 to vector<8x128xf32>
    %17 = arith.mulf %16, %15 : vector<8x128xf32>
    %18 = arith.select %12, %10, %17 : vector<8x128xi1>, vector<8x128xf32>
    %c0_13 = arith.constant 0 : index
    %c0_14 = arith.constant 0 : index
    %19 = vector.load %arg6[%c0_13, %c0_14] : memref<128x64xf32, #tpu.memory_space<vmem>>, vector<128x64xf32>
    %cst_15 = arith.constant dense<0.000000e+00> : vector<8x64xf32>
    %20 = tpu.matmul %18, %19, %cst_15 {dimension_numbers = #tpu.dot_dimension_numbers<[1], [0], [0], [1], [0, 0, 1, 1], [], []>} : vector<8x128xf32>, vector<128x64xf32>, vector<8x64xf32> -> vector<8x64xf32>
    %c0_16 = arith.constant 0 : index
    %c0_17 = arith.constant 0 : index
    %21 = vector.load %arg7[%c0_16, %c0_17] : memref<1x64xf32, #tpu.memory_space<vmem>>, vector<1x64xf32>
    %22 = vector.broadcast %21 : vector<1x64xf32> to vector<8x64xf32>
    %23 = arith.addf %20, %22 : vector<8x64xf32>
    %cst_18 = arith.constant 0.000000e+00 : f32
    %24 = vector.broadcast %cst_18 : f32 to vector<8x64xf32>
    %25 = arith.cmpf ogt, %23, %24 : vector<8x64xf32>
    %26 = math.exp %23 : vector<8x64xf32>
    %cst_19 = arith.constant 1.000000e+00 : f32
    %27 = vector.broadcast %cst_19 : f32 to vector<8x64xf32>
    %28 = arith.subf %26, %27 : vector<8x64xf32>
    %cst_20 = arith.constant 1.67326319 : f32
    %29 = vector.broadcast %cst_20 : f32 to vector<8x64xf32>
    %30 = arith.mulf %29, %28 : vector<8x64xf32>
    %31 = arith.select %25, %23, %30 : vector<8x64xi1>, vector<8x64xf32>
    %c0_21 = arith.constant 0 : index
    %c0_22 = arith.constant 0 : index
    %32 = vector.load %arg8[%c0_21, %c0_22] : memref<64x16xf32, #tpu.memory_space<vmem>>, vector<64x16xf32>
    %cst_23 = arith.constant dense<0.000000e+00> : vector<8x16xf32>
    %33 = tpu.matmul %31, %32, %cst_23 {dimension_numbers = #tpu.dot_dimension_numbers<[1], [0], [0], [1], [0, 0, 1, 1], [], []>} : vector<8x64xf32>, vector<64x16xf32>, vector<8x16xf32> -> vector<8x16xf32>
    %c0_24 = arith.constant 0 : index
    %c0_25 = arith.constant 0 : index
    %34 = vector.load %arg9[%c0_24, %c0_25] : memref<1x16xf32, #tpu.memory_space<vmem>>, vector<1x16xf32>
    %35 = vector.broadcast %34 : vector<1x16xf32> to vector<8x16xf32>
    %36 = arith.addf %33, %35 : vector<8x16xf32>
    %c0_26 = arith.constant 0 : index
    %c0_27 = arith.constant 0 : index
    %37 = vector.load %arg10[%c0_26, %c0_27] : memref<8x16xf32, #tpu.memory_space<vmem>>, vector<8x16xf32>
    tpu.vector_store %arg10[%c0_26, %c0_27], %36 {strides = array<i32>} : memref<8x16xf32, #tpu.memory_space<vmem>>, vector<8x16xf32>,
    return
  }
  func.func @transform_0(%arg0: i32) -> (i32, i32) {
    %c0_i32 = arith.constant 0 : i32
    %c0_i32_0 = arith.constant 0 : i32
    return %arg0, %c0_i32 : i32, i32
  }
  func.func @transform_1(%arg0: i32) -> (i32, i32) {
    %c0_i32 = arith.constant 0 : i32
    %c0_i32_0 = arith.constant 0 : i32
    %c0_i32_1 = arith.constant 0 : i32
    return %c0_i32, %c0_i32_0 : i32, i32
  }
  func.func @transform_2(%arg0: i32) -> (i32, i32) {
    %c0_i32 = arith.constant 0 : i32
    %c0_i32_0 = arith.constant 0 : i32
    %c0_i32_1 = arith.constant 0 : i32
    return %c0_i32, %c0_i32_0 : i32, i32
  }
  func.func @transform_3(%arg0: i32) -> (i32, i32) {
    %c0_i32 = arith.constant 0 : i32
    %c0_i32_0 = arith.constant 0 : i32
    %c0_i32_1 = arith.constant 0 : i32
    return %c0_i32, %c0_i32_0 : i32, i32
  }
  func.func @transform_4(%arg0: i32) -> (i32, i32) {
    %c0_i32 = arith.constant 0 : i32
    %c0_i32_0 = arith.constant 0 : i32
    %c0_i32_1 = arith.constant 0 : i32
    return %c0_i32, %c0_i32_0 : i32, i32
  }
  func.func @transform_5(%arg0: i32) -> (i32, i32) {
    %c0_i32 = arith.constant 0 : i32
    %c0_i32_0 = arith.constant 0 : i32
    %c0_i32_1 = arith.constant 0 : i32
    return %c0_i32, %c0_i32_0 : i32, i32
  }
  func.func @transform_6(%arg0: i32) -> (i32, i32) {
    %c0_i32 = arith.constant 0 : i32
    %c0_i32_0 = arith.constant 0 : i32
    %c0_i32_1 = arith.constant 0 : i32
    return %c0_i32, %c0_i32_0 : i32, i32
  }
  func.func @transform_7(%arg0: i32) -> (i32, i32) {
    %c0_i32 = arith.constant 0 : i32
    %c0_i32_0 = arith.constant 0 : i32
    %c0_i32_1 = arith.constant 0 : i32
    return %c0_i32, %c0_i32_0 : i32, i32
  }
  func.func @transform_8(%arg0: i32) -> (i32, i32) {
    %c0_i32 = arith.constant 0 : i32
    %c0_i32_0 = arith.constant 0 : i32
    %c0_i32_1 = arith.constant 0 : i32
    return %c0_i32, %c0_i32_0 : i32, i32
  }
  func.func @transform_9(%arg0: i32) -> (i32, i32) {
    %c0_i32 = arith.constant 0 : i32
    %c0_i32_0 = arith.constant 0 : i32
    return %arg0, %c0_i32 : i32, i32
  }
}

</mosaic_0001>

<llo_original>
// kernel: decoder_forward.1
$region0: #{decoder_forward.1}
  #allocation0 [shape = 'u32[]', space=smem, size = 0x4, offset = 0x4, fixed_abs, tag = 'smem constant byte address 0x4 - core index']
  #allocation1 [shape = 'u32[144,128]{1,0:T(1,128)}', space=vmem, size = 0x12000, scoped, tag = 'internal scratch']
  %s0 = inlined_call_operand.vmem [shape: f32[8,8], index: 0, kind: input, shape index: {}]
  %s1 = inlined_call_operand.vmem [shape: f32[8,256], index: 1, kind: input, shape index: {}]
  %s2 = inlined_call_operand.vmem [shape: f32[1,256], index: 2, kind: input, shape index: {}]
  %s3 = inlined_call_operand.vmem [shape: f32[256,128], index: 3, kind: input, shape index: {}]
  %s4 = inlined_call_operand.vmem [shape: f32[1,128], index: 4, kind: input, shape index: {}]
  %s5 = inlined_call_operand.vmem [shape: f32[128,64], index: 5, kind: input, shape index: {}]
  %s6 = inlined_call_operand.vmem [shape: f32[1,64], index: 6, kind: input, shape index: {}]
  %s7 = inlined_call_operand.vmem [shape: f32[64,16], index: 7, kind: input, shape index: {}]
  %s8 = inlined_call_operand.vmem [shape: f32[1,16], index: 8, kind: input, shape index: {}]
  %s9 = inlined_call_operand.vmem [shape: f32[8,16], index: 9, kind: output, shape index: {}]
  %s10 = sld [smem:[#allocation0]]
  $region46: #{decoder_forward.1} parent=0
    _
  %s12 = ssub.s32 1, %s10
  %s13 = scalar_select 0, %s12, %s10
  // Predicated region
  $region2: #{decoder_forward.1} parent=0 // pred_check
    _
  $region3: #{decoder_forward.1} parent=0 // pred_check_branch
    %15 = sbr.rel (0) target = $region5
  $region4: #{decoder_forward.1} parent=0 // pred_region
    _
  $region5: #{decoder_forward.1} parent=0 // pred_fallthru
    _
  // Predicated region
  $region6: #{decoder_forward.1} parent=0 // pred_check
    _
  $region7: #{decoder_forward.1} parent=0 // pred_check_branch
    %17 = sbr.rel (0) target = $region9
  $region8: #{decoder_forward.1} parent=0 // pred_region
    _
  $region9: #{decoder_forward.1} parent=0 // pred_fallthru
    _
  // Predicated region
  $region10: #{decoder_forward.1} parent=0 // pred_check
    _
  $region11: #{decoder_forward.1} parent=0 // pred_check_branch
    %19 = sbr.rel (0) target = $region13
  $region12: #{decoder_forward.1} parent=0 // pred_region
    _
  $region13: #{decoder_forward.1} parent=0 // pred_fallthru
    _
  // Predicated region
  $region14: #{decoder_forward.1} parent=0 // pred_check
    _
  $region15: #{decoder_forward.1} parent=0 // pred_check_branch
    %21 = sbr.rel (0) target = $region17
  $region16: #{decoder_forward.1} parent=0 // pred_region
    _
  $region17: #{decoder_forward.1} parent=0 // pred_fallthru
    _
  // Predicated region
  $region18: #{decoder_forward.1} parent=0 // pred_check
    _
  $region19: #{decoder_forward.1} parent=0 // pred_check_branch
    %23 = sbr.rel (0) target = $region21
  $region20: #{decoder_forward.1} parent=0 // pred_region
    _
  $region21: #{decoder_forward.1} parent=0 // pred_fallthru
    _
  // Predicated region
  $region22: #{decoder_forward.1} parent=0 // pred_check
    _
  $region23: #{decoder_forward.1} parent=0 // pred_check_branch
    %25 = sbr.rel (0) target = $region25
  $region24: #{decoder_forward.1} parent=0 // pred_region
    _
  $region25: #{decoder_forward.1} parent=0 // pred_fallthru
    _
  // Predicated region
  $region26: #{decoder_forward.1} parent=0 // pred_check
    _
  $region27: #{decoder_forward.1} parent=0 // pred_check_branch
    %27 = sbr.rel (0) target = $region29
  $region28: #{decoder_forward.1} parent=0 // pred_region
    _
  $region29: #{decoder_forward.1} parent=0 // pred_fallthru
    _
  // Predicated region
  $region30: #{decoder_forward.1} parent=0 // pred_check
    _
  $region31: #{decoder_forward.1} parent=0 // pred_check_branch
    %29 = sbr.rel (0) target = $region33
  $region32: #{decoder_forward.1} parent=0 // pred_region
    _
  $region33: #{decoder_forward.1} parent=0 // pred_fallthru
    _
  // Predicated region
  $region34: #{decoder_forward.1} parent=0 // pred_check
    _
  $region35: #{decoder_forward.1} parent=0 // pred_check_branch
    %31 = sbr.rel (0) target = $region37
  $region36: #{decoder_forward.1} parent=0 // pred_region
    _
  $region37: #{decoder_forward.1} parent=0 // pred_fallthru
    _
  %v32 = vld [vmem:[%s0] sm:$0xff]
  %v33 = vld [vmem:[%s1] sm:$0xff]
  %v34 = vld [vmem:[%s1 + $0x8] sm:$0xff]
  %v35 = vld [vmem:[%s2] sm:$0x3]
  %v37 = vlaneseq
  %v38 = vshrl.u32 %v37, 7
  %v39 = vsub.s32 0, %v38
  %v40 = vrot.slane %v35, %v39
  %v41 = vlaneseq
  %v42 = vshrl.u32 %v41, 7
  %v43 = vsub.s32 1, %v42
  %v44 = vrot.slane %v35, %v43
  %vm47 = vcmask 64512
  %v49 = vsel %vm47, %v32, 0
  %51 = vmatprep.subr.mxu0 0.0
  %52 = vmatpush1.msra.mxu0 0.0
  %53 = vmatprep.subr.mxu0 0.0
  %54 = vmatpush1.msra.mxu0 0.0
  %55 = vmatprep.subr.mxu0 0.0
  %56 = vmatpush1.msra.mxu0 0.0
  %57 = vmatprep.subr.mxu0 0.0
  %58 = vmatpush1.msra.mxu0 0.0
  %59 = vmatprep.subr.mxu0 0.0
  %60 = vmatpush1.msra.mxu0 0.0
  %61 = vmatprep.subr.mxu0 0.0
  %62 = vmatpush1.msra.mxu0 0.0
  %63 = vmatprep.subr.mxu0 0.0
  %64 = vmatpush1.msra.mxu0 0.0
  %65 = vmatprep.subr.mxu0 0.0
  %66 = vmatpush1.msra.mxu0 0.0
  %67 = vmatprep.subr.mxu0 0.0
  %68 = vmatpush1.msra.mxu0 0.0
  %69 = vmatprep.subr.mxu0 0.0
  %70 = vmatpush1.msra.mxu0 0.0
  %71 = vmatprep.subr.mxu0 0.0
  %72 = vmatpush1.msra.mxu0 0.0
  %73 = vmatprep.subr.mxu0 0.0
  %74 = vmatpush1.msra.mxu0 0.0
  %75 = vmatprep.subr.mxu0 0.0
  %76 = vmatpush1.msra.mxu0 0.0
  %77 = vmatprep.subr.mxu0 0.0
  %78 = vmatpush1.msra.mxu0 0.0
  %79 = vmatprep.subr.mxu0 0.0
  %80 = vmatpush1.msra.mxu0 0.0
  %81 = vmatprep.subr.mxu0 %v34
  %82 = vmatpush1.msra.mxu0 %v33
  %83 = vmatprep.subr.mxu0 0.0
  %84 = vmatpush2.msra.mxu0 0.0
  %85 = vmatprep.subr.mxu0 0.0
  %86 = vmatpush2.msra.mxu0 0.0
  %87 = vmatprep.subr.mxu0 0.0
  %88 = vmatpush2.msra.mxu0 0.0
  %89 = vmatprep.subr.mxu0 0.0
  %90 = vmatpush2.msra.mxu0 0.0
  %91 = vmatprep.subr.mxu0 0.0
  %92 = vmatpush2.msra.mxu0 0.0
  %93 = vmatprep.subr.mxu0 0.0
  %94 = vmatpush2.msra.mxu0 0.0
  %95 = vmatprep.subr.mxu0 0.0
  %96 = vmatpush2.msra.mxu0 0.0
  %97 = vmatprep.subr.mxu0 0.0
  %98 = vmatpush2.msra.mxu0 0.0
  %99 = vmatprep.subr.mxu0 0.0
  %100 = vmatpush2.msra.mxu0 0.0
  %101 = vmatprep.subr.mxu0 0.0
  %102 = vmatpush2.msra.mxu0 0.0
  %103 = vmatprep.subr.mxu0 0.0
  %104 = vmatpush2.msra.mxu0 0.0
  %105 = vmatprep.subr.mxu0 0.0
  %106 = vmatpush2.msra.mxu0 0.0
  %107 = vmatprep.subr.mxu0 0.0
  %108 = vmatpush2.msra.mxu0 0.0
  %109 = vmatprep.subr.mxu0 0.0
  %110 = vmatpush2.msra.mxu0 0.0
  %111 = vmatprep.subr.mxu0 0.0
  %112 = vmatpush2.msra.mxu0 0.0
  %113 = vmatprep.subr.mxu0 0.0
  %114 = vmatpush2.msra.mxu0 0.0
  %115 = vmatprep.mubr.f32.mxu0 0.0
  %116 = vmatmul.mubr.f32.gmra.mxu0 %v49
  %v117 = vpop.f32.mrf.mxu0
  %v118 = vadd.f32 %v40, %v117
  %v119 = vpop.f32.mrf.mxu0
  %v120 = vadd.f32 %v44, %v119
  %121 = vdwg.mxu0
  %v122 = vld [vmem:[%s3] sm:$0xff]
  %v123 = vld [vmem:[%s3 + $0x8] sm:$0xff]
  %v124 = vld [vmem:[%s3 + $0x10] sm:$0xff]
  %v125 = vld [vmem:[%s3 + $0x18] sm:$0xff]
  %v126 = vld [vmem:[%s3 + $0x20] sm:$0xff]
  %v127 = vld [vmem:[%s3 + $0x28] sm:$0xff]
  %v128 = vld [vmem:[%s3 + $0x30] sm:$0xff]
  %v129 = vld [vmem:[%s3 + $0x38] sm:$0xff]
  %v130 = vld [vmem:[%s3 + $0x40] sm:$0xff]
  %v131 = vld [vmem:[%s3 + $0x48] sm:$0xff]
  %v132 = vld [vmem:[%s3 + $0x50] sm:$0xff]
  %v133 = vld [vmem:[%s3 + $0x58] sm:$0xff]
  %v134 = vld [vmem:[%s3 + $0x60] sm:$0xff]
  %v135 = vld [vmem:[%s3 + $0x68] sm:$0xff]
  %v136 = vld [vmem:[%s3 + $0x70] sm:$0xff]
  %v137 = vld [vmem:[%s3 + $0x78] sm:$0xff]
  %v138 = vld [vmem:[%s3 + $0x80] sm:$0xff]
  %v139 = vld [vmem:[%s3 + $0x88] sm:$0xff]
  %v140 = vld [vmem:[%s3 + $0x90] sm:$0xff]
  %v141 = vld [vmem:[%s3 + $0x98] sm:$0xff]
  %v142 = vld [vmem:[%s3 + $0xa0] sm:$0xff]
  %v143 = vld [vmem:[%s3 + $0xa8] sm:$0xff]
  %v144 = vld [vmem:[%s3 + $0xb0] sm:$0xff]
  %v145 = vld [vmem:[%s3 + $0xb8] sm:$0xff]
  %v146 = vld [vmem:[%s3 + $0xc0] sm:$0xff]
  %v147 = vld [vmem:[%s3 + $0xc8] sm:$0xff]
  %v148 = vld [vmem:[%s3 + $0xd0] sm:$0xff]
  %v149 = vld [vmem:[%s3 + $0xd8] sm:$0xff]
  %v150 = vld [vmem:[%s3 + $0xe0] sm:$0xff]
  %v151 = vld [vmem:[%s3 + $0xe8] sm:$0xff]
  %v152 = vld [vmem:[%s3 + $0xf0] sm:$0xff]
  %v153 = vld [vmem:[%s3 + $0xf8] sm:$0xff]
  %v154 = vld [vmem:[%s4] sm:$0x1]
  %v156 = vlaneseq
  %v157 = vshrl.u32 %v156, 7
  %v158 = vsub.s32 0, %v157
  %v159 = vrot.slane %v154, %v158
  %161 = vmatprep.subr.mxu0 0.0
  %162 = vmatpush1.msra.mxu0 %v137
  %163 = vmatprep.subr.mxu0 0.0
  %164 = vmatpush1.msra.mxu0 %v136
  %165 = vmatprep.subr.mxu0 0.0
  %166 = vmatpush1.msra.mxu0 %v135
  %167 = vmatprep.subr.mxu0 0.0
  %168 = vmatpush1.msra.mxu0 %v134
  %169 = vmatprep.subr.mxu0 0.0
  %170 = vmatpush1.msra.mxu0 %v133
  %171 = vmatprep.subr.mxu0 0.0
  %172 = vmatpush1.msra.mxu0 %v132
  %173 = vmatprep.subr.mxu0 0.0
  %174 = vmatpush1.msra.mxu0 %v131
  %175 = vmatprep.subr.mxu0 0.0
  %176 = vmatpush1.msra.mxu0 %v130
  %177 = vmatprep.subr.mxu0 0.0
  %178 = vmatpush1.msra.mxu0 %v129
  %179 = vmatprep.subr.mxu0 0.0
  %180 = vmatpush1.msra.mxu0 %v128
  %181 = vmatprep.subr.mxu0 0.0
  %182 = vmatpush1.msra.mxu0 %v127
  %183 = vmatprep.subr.mxu0 0.0
  %184 = vmatpush1.msra.mxu0 %v126
  %185 = vmatprep.subr.mxu0 0.0
  %186 = vmatpush1.msra.mxu0 %v125
  %187 = vmatprep.subr.mxu0 0.0
  %188 = vmatpush1.msra.mxu0 %v124
  %189 = vmatprep.subr.mxu0 0.0
  %190 = vmatpush1.msra.mxu0 %v123
  %191 = vmatprep.subr.mxu0 0.0
  %192 = vmatpush1.msra.mxu0 %v122
  %193 = vmatprep.subr.mxu0 0.0
  %194 = vmatpush2.msra.mxu0 %v153
  %195 = vmatprep.subr.mxu0 0.0
  %196 = vmatpush2.msra.mxu0 %v152
  %197 = vmatprep.subr.mxu0 0.0
  %198 = vmatpush2.msra.mxu0 %v151
  %199 = vmatprep.subr.mxu0 0.0
  %200 = vmatpush2.msra.mxu0 %v150
  %201 = vmatprep.subr.mxu0 0.0
  %202 = vmatpush2.msra.mxu0 %v149
  %203 = vmatprep.subr.mxu0 0.0
  %204 = vmatpush2.msra.mxu0 %v148
  %205 = vmatprep.subr.mxu0 0.0
  %206 = vmatpush2.msra.mxu0 %v147
  %207 = vmatprep.subr.mxu0 0.0
  %208 = vmatpush2.msra.mxu0 %v146
  %209 = vmatprep.subr.mxu0 0.0
  %210 = vmatpush2.msra.mxu0 %v145
  %211 = vmatprep.subr.mxu0 0.0
  %212 = vmatpush2.msra.mxu0 %v144
  %213 = vmatprep.subr.mxu0 0.0
  %214 = vmatpush2.msra.mxu0 %v143
  %215 = vmatprep.subr.mxu0 0.0
  %216 = vmatpush2.msra.mxu0 %v142
  %217 = vmatprep.subr.mxu0 0.0
  %218 = vmatpush2.msra.mxu0 %v141
  %219 = vmatprep.subr.mxu0 0.0
  %220 = vmatpush2.msra.mxu0 %v140
  %221 = vmatprep.subr.mxu0 0.0
  %222 = vmatpush2.msra.mxu0 %v139
  %223 = vmatprep.subr.mxu0 0.0
  %224 = vmatpush2.msra.mxu0 %v138
  %225 = vmatprep.mubr.f32.mxu0 %v120
  %226 = vmatmul.mubr.f32.gmra.mxu0 %v118
  %v227 = vpop.f32.mrf.mxu0
  %v228 = vadd.f32 %v159, %v227
  %v229 = vpop.f32.mrf.mxu0
  %230 = vdwg.mxu0
  %vm231 = vcmp.gt.f32.partialorder %v228, 0.0
  %v232 = vmul.f32 %v228, 1.442695
  %v233 = vpow.pop %v232
  %v234 = vsub.f32 %v233, 1.0
  %v235 = vmul.f32 %v234, 1.6732632
  %v236 = vsel %vm231, %v228, %v235
  %v237 = vld [vmem:[%s5] sm:$0xff]
  %v238 = vld [vmem:[%s5 + $0x8] sm:$0xff]
  %v239 = vld [vmem:[%s5 + $0x10] sm:$0xff]
  %v240 = vld [vmem:[%s5 + $0x18] sm:$0xff]
  %v241 = vld [vmem:[%s5 + $0x20] sm:$0xff]
  %v242 = vld [vmem:[%s5 + $0x28] sm:$0xff]
  %v243 = vld [vmem:[%s5 + $0x30] sm:$0xff]
  %v244 = vld [vmem:[%s5 + $0x38] sm:$0xff]
  %v245 = vld [vmem:[%s5 + $0x40] sm:$0xff]
  %v246 = vld [vmem:[%s5 + $0x48] sm:$0xff]
  %v247 = vld [vmem:[%s5 + $0x50] sm:$0xff]
  %v248 = vld [vmem:[%s5 + $0x58] sm:$0xff]
  %v249 = vld [vmem:[%s5 + $0x60] sm:$0xff]
  %v250 = vld [vmem:[%s5 + $0x68] sm:$0xff]
  %v251 = vld [vmem:[%s5 + $0x70] sm:$0xff]
  %v252 = vld [vmem:[%s5 + $0x78] sm:$0xff]
  %v253 = vld [vmem:[%s6] sm:$0x1]
  %v255 = vlaneseq
  %v256 = vshrl.u32 %v255, 7
  %v257 = vsub.s32 0, %v256
  %v258 = vrot.slane %v253, %v257
  %260 = vmatprep.subr.mxu0 0.0
  %261 = vmatpush1.msra.mxu0 %v252
  %262 = vmatprep.subr.mxu0 0.0
  %263 = vmatpush1.msra.mxu0 %v251
  %264 = vmatprep.subr.mxu0 0.0
  %265 = vmatpush1.msra.mxu0 %v250
  %266 = vmatprep.subr.mxu0 0.0
  %267 = vmatpush1.msra.mxu0 %v249
  %268 = vmatprep.subr.mxu0 0.0
  %269 = vmatpush1.msra.mxu0 %v248
  %270 = vmatprep.subr.mxu0 0.0
  %271 = vmatpush1.msra.mxu0 %v247
  %272 = vmatprep.subr.mxu0 0.0
  %273 = vmatpush1.msra.mxu0 %v246
  %274 = vmatprep.subr.mxu0 0.0
  %275 = vmatpush1.msra.mxu0 %v245
  %276 = vmatprep.subr.mxu0 0.0
  %277 = vmatpush1.msra.mxu0 %v244
  %278 = vmatprep.subr.mxu0 0.0
  %279 = vmatpush1.msra.mxu0 %v243
  %280 = vmatprep.subr.mxu0 0.0
  %281 = vmatpush1.msra.mxu0 %v242
  %282 = vmatprep.subr.mxu0 0.0
  %283 = vmatpush1.msra.mxu0 %v241
  %284 = vmatprep.subr.mxu0 0.0
  %285 = vmatpush1.msra.mxu0 %v240
  %286 = vmatprep.subr.mxu0 0.0
  %287 = vmatpush1.msra.mxu0 %v239
  %288 = vmatprep.subr.mxu0 0.0
  %289 = vmatpush1.msra.mxu0 %v238
  %290 = vmatprep.subr.mxu0 0.0
  %291 = vmatpush1.msra.mxu0 %v237
  %292 = vmatprep.subr.mxu0 0.0
  %293 = vmatpush2.msra.mxu0 0.0
  %294 = vmatprep.subr.mxu0 0.0
  %295 = vmatpush2.msra.mxu0 0.0
  %296 = vmatprep.subr.mxu0 0.0
  %297 = vmatpush2.msra.mxu0 0.0
  %298 = vmatprep.subr.mxu0 0.0
  %299 = vmatpush2.msra.mxu0 0.0
  %300 = vmatprep.subr.mxu0 0.0
  %301 = vmatpush2.msra.mxu0 0.0
  %302 = vmatprep.subr.mxu0 0.0
  %303 = vmatpush2.msra.mxu0 0.0
  %304 = vmatprep.subr.mxu0 0.0
  %305 = vmatpush2.msra.mxu0 0.0
  %306 = vmatprep.subr.mxu0 0.0
  %307 = vmatpush2.msra.mxu0 0.0
  %308 = vmatprep.subr.mxu0 0.0
  %309 = vmatpush2.msra.mxu0 0.0
  %310 = vmatprep.subr.mxu0 0.0
  %311 = vmatpush2.msra.mxu0 0.0
  %312 = vmatprep.subr.mxu0 0.0
  %313 = vmatpush2.msra.mxu0 0.0
  %314 = vmatprep.subr.mxu0 0.0
  %315 = vmatpush2.msra.mxu0 0.0
  %316 = vmatprep.subr.mxu0 0.0
  %317 = vmatpush2.msra.mxu0 0.0
  %318 = vmatprep.subr.mxu0 0.0
  %319 = vmatpush2.msra.mxu0 0.0
  %320 = vmatprep.subr.mxu0 0.0
  %321 = vmatpush2.msra.mxu0 0.0
  %322 = vmatprep.subr.mxu0 0.0
  %323 = vmatpush2.msra.mxu0 0.0
  %324 = vmatprep.mubr.f32.mxu0 0.0
  %325 = vmatmul.mubr.f32.gmra.mxu0 %v236
  %v326 = vpop.f32.mrf.mxu0
  %v327 = vadd.f32 %v258, %v326
  %v328 = vpop.f32.mrf.mxu0
  %329 = vdwg.mxu0
  %vm330 = vcmp.gt.f32.partialorder %v327, 0.0
  %v331 = vmul.f32 %v327, 1.442695
  %v332 = vpow.pop %v331
  %v333 = vsub.f32 %v332, 1.0
  %v334 = vmul.f32 %v333, 1.6732632
  %v335 = vsel %vm330, %v327, %v334
  %v336 = vld [vmem:[%s7] sm:$0xff]
  %v337 = vld [vmem:[%s7 + $0x8] sm:$0xff]
  %v338 = vld [vmem:[%s7 + $0x10] sm:$0xff]
  %v339 = vld [vmem:[%s7 + $0x18] sm:$0xff]
  %v340 = vld [vmem:[%s7 + $0x20] sm:$0xff]
  %v341 = vld [vmem:[%s7 + $0x28] sm:$0xff]
  %v342 = vld [vmem:[%s7 + $0x30] sm:$0xff]
  %v343 = vld [vmem:[%s7 + $0x38] sm:$0xff]
  %v344 = vld [vmem:[%s8] sm:$0x1]
  %v346 = vlaneseq
  %v347 = vshrl.u32 %v346, 7
  %v348 = vsub.s32 0, %v347
  %v349 = vrot.slane %v344, %v348
  %vm351 = vcmask 523264
  %v353 = vsel %vm351, %v335, 0
  %355 = vmatprep.subr.mxu0 0.0
  %356 = vmatpush1.msra.mxu0 0.0
  %357 = vmatprep.subr.mxu0 0.0
  %358 = vmatpush1.msra.mxu0 0.0
  %359 = vmatprep.subr.mxu0 0.0
  %360 = vmatpush1.msra.mxu0 0.0
  %361 = vmatprep.subr.mxu0 0.0
  %362 = vmatpush1.msra.mxu0 0.0
  %363 = vmatprep.subr.mxu0 0.0
  %364 = vmatpush1.msra.mxu0 0.0
  %365 = vmatprep.subr.mxu0 0.0
  %366 = vmatpush1.msra.mxu0 0.0
  %367 = vmatprep.subr.mxu0 0.0
  %368 = vmatpush1.msra.mxu0 0.0
  %369 = vmatprep.subr.mxu0 0.0
  %370 = vmatpush1.msra.mxu0 0.0
  %371 = vmatprep.subr.mxu0 0.0
  %372 = vmatpush1.msra.mxu0 %v343
  %373 = vmatprep.subr.mxu0 0.0
  %374 = vmatpush1.msra.mxu0 %v342
  %375 = vmatprep.subr.mxu0 0.0
  %376 = vmatpush1.msra.mxu0 %v341
  %377 = vmatprep.subr.mxu0 0.0
  %378 = vmatpush1.msra.mxu0 %v340
  %379 = vmatprep.subr.mxu0 0.0
  %380 = vmatpush1.msra.mxu0 %v339
  %381 = vmatprep.subr.mxu0 0.0
  %382 = vmatpush1.msra.mxu0 %v338
  %383 = vmatprep.subr.mxu0 0.0
  %384 = vmatpush1.msra.mxu0 %v337
  %385 = vmatprep.subr.mxu0 0.0
  %386 = vmatpush1.msra.mxu0 %v336
  %387 = vmatprep.subr.mxu0 0.0
  %388 = vmatpush2.msra.mxu0 0.0
  %389 = vmatprep.subr.mxu0 0.0
  %390 = vmatpush2.msra.mxu0 0.0
  %391 = vmatprep.subr.mxu0 0.0
  %392 = vmatpush2.msra.mxu0 0.0
  %393 = vmatprep.subr.mxu0 0.0
  %394 = vmatpush2.msra.mxu0 0.0
  %395 = vmatprep.subr.mxu0 0.0
  %396 = vmatpush2.msra.mxu0 0.0
  %397 = vmatprep.subr.mxu0 0.0
  %398 = vmatpush2.msra.mxu0 0.0
  %399 = vmatprep.subr.mxu0 0.0
  %400 = vmatpush2.msra.mxu0 0.0
  %401 = vmatprep.subr.mxu0 0.0
  %402 = vmatpush2.msra.mxu0 0.0
  %403 = vmatprep.subr.mxu0 0.0
  %404 = vmatpush2.msra.mxu0 0.0
  %405 = vmatprep.subr.mxu0 0.0
  %406 = vmatpush2.msra.mxu0 0.0
  %407 = vmatprep.subr.mxu0 0.0
  %408 = vmatpush2.msra.mxu0 0.0
  %409 = vmatprep.subr.mxu0 0.0
  %410 = vmatpush2.msra.mxu0 0.0
  %411 = vmatprep.subr.mxu0 0.0
  %412 = vmatpush2.msra.mxu0 0.0
  %413 = vmatprep.subr.mxu0 0.0
  %414 = vmatpush2.msra.mxu0 0.0
  %415 = vmatprep.subr.mxu0 0.0
  %416 = vmatpush2.msra.mxu0 0.0
  %417 = vmatprep.subr.mxu0 0.0
  %418 = vmatpush2.msra.mxu0 0.0
  %419 = vmatprep.mubr.f32.mxu0 0.0
  %420 = vmatmul.mubr.f32.gmra.mxu0 %v353
  %v421 = vpop.f32.mrf.mxu0
  %v422 = vadd.f32 %v349, %v421
  %v423 = vpop.f32.mrf.mxu0
  %424 = vdwg.mxu0
  %vm425 = vcmask 130048
  %426 = vst.msk [vmem:[%s9] sm:$0xff] %vm425, %v422
  // Predicated region
  $region38: #{decoder_forward.1} parent=0 // pred_check
    _
  $region39: #{decoder_forward.1} parent=0 // pred_check_branch
    %428 = sbr.rel (0) target = $region41
  $region40: #{decoder_forward.1} parent=0 // pred_region
    _
  $region41: #{decoder_forward.1} parent=0 // pred_fallthru
    _
  // Predicated region
  $region42: #{decoder_forward.1} parent=0 // pred_check
    _
  $region43: #{decoder_forward.1} parent=0 // pred_check_branch
    %430 = sbr.rel (0) target = $region45
  $region44: #{decoder_forward.1} parent=0 // pred_region
    _
  $region45: #{decoder_forward.1} parent=0 // pred_fallthru
    _

</llo_original>
